<compile_context>
chip_gen: v5e
topology: v5e:2x2
jax: 0.10.0
libtpu: 0.0.40
codegen_flags: <defaults>
</compile_context>

<pallas_src>
import jax
import jax.numpy as jnp
from jax.experimental import pallas as pl
from jax.experimental.pallas import tpu as pltpu


def _round_up(x, m):
    return ((x + m - 1) // m) * m


# ----------------------------- Pallas kernel --------------------------------

def _mlp_kernel(x_ref,
                w1_ref, s1_ref, t1_ref,
                w2_ref, s2_ref, t2_ref,
                w3_ref, s3_ref, t3_ref,
                wo_ref, bo_ref,
                o_ref):
    """Fused MLP: 3x (bf16 matmul -> folded-BN affine -> relu) -> dot-product output."""
    x = x_ref[...]                                                    # (TILE_B, D_pad) bf16

    h1 = jnp.dot(x, w1_ref[...], preferred_element_type=jnp.float32)
    h1 = jnp.maximum(h1 * s1_ref[...] + t1_ref[...], 0.0)

    h2 = jnp.dot(h1.astype(jnp.bfloat16), w2_ref[...],
                 preferred_element_type=jnp.float32)
    h2 = jnp.maximum(h2 * s2_ref[...] + t2_ref[...], 0.0)

    h3 = jnp.dot(h2.astype(jnp.bfloat16), w3_ref[...],
                 preferred_element_type=jnp.float32)
    h3 = jnp.maximum(h3 * s3_ref[...] + t3_ref[...], 0.0)            # (TILE_B, H3_pad) f32

    # Final (H3 -> 1) layer: VPU multiply + cross-lane reduce instead of an N=1 MXU pass;
    # store lane-dense with the batch mapped to lanes.
    o = jnp.sum(h3 * wo_ref[...], axis=-1) + bo_ref[0]               # (TILE_B,)
    o_ref[...] = o.reshape(o_ref.shape)


def mlp_forward_pallas(x, params):
    """x: (B, D) float32 combined features. params: dict of padded/folded weights."""
    B, D = x.shape
    D_pad = params["w1"].shape[0]

    # MXU-matched batch tile (256 = one v6e/v7x MXU M pass, 2x the v5e 128 pass);
    # clamp to a sublane multiple for tiny batches (single full-array block then).
    tile_b = 256 if B >= 256 else _round_up(B, 8)
    b_pad = _round_up(B, tile_b)
    num_blocks = b_pad // tile_b

    x_p = jnp.zeros((b_pad, D_pad), jnp.bfloat16)
    x_p = x_p.at[:B, :D].set(x.astype(jnp.bfloat16))

    def _resident(shape):
        # Whole-array block with a constant index map -> stays VMEM-resident, no re-DMA.
        return pl.BlockSpec(shape, lambda i, n=len(shape): (0,) * n)

    in_specs = [
        pl.BlockSpec((tile_b, D_pad), lambda i: (i, 0)),             # x: batch-tiled
        _resident(params["w1"].shape), _resident(params["s1"].shape),
        _resident(params["t1"].shape),
        _resident(params["w2"].shape), _resident(params["s2"].shape),
        _resident(params["t2"].shape),
        _resident(params["w3"].shape), _resident(params["s3"].shape),
        _resident(params["t3"].shape),
        _resident(params["wo"].shape),
        pl.BlockSpec(memory_space=pltpu.MemorySpace.SMEM),           # bo scalar in SMEM
    ]
    out_specs = pl.BlockSpec((1, 1, tile_b), lambda i: (i, 0, 0))

    out = pl.pallas_call(
        _mlp_kernel,
        out_shape=jax.ShapeDtypeStruct((num_blocks, 1, tile_b), jnp.float32),
        grid=(num_blocks,),
        in_specs=in_specs,
        out_specs=out_specs,
        compiler_params=pltpu.CompilerParams(
            dimension_semantics=("parallel",)),
    )(x_p,
      params["w1"], params["s1"], params["t1"],
      params["w2"], params["s2"], params["t2"],
      params["w3"], params["s3"], params["t3"],
      params["wo"], params["bo"])

    return out.reshape(b_pad, 1)[:B]


# --------------------------- parameter construction --------------------------

def _fold_bn(bias, gamma, beta, mean, var, eps=1e-5):
    """Fold Linear bias + BatchNorm1d (eval) into per-feature scale/shift."""
    inv_std = 1.0 / jnp.sqrt(var + eps)
    scale = gamma * inv_std
    shift = (bias - mean) * scale + beta
    return scale, shift


def init_params(key, num_numerical, embedding_dims):
    """Deterministic synthetic parameters matching the module's shapes (padded for TPU)."""
    keys = jax.random.split(key, 16)
    ki = iter(keys)

    embed_tables = {}
    emb_out = 0
    for col, (num_cat, dim) in embedding_dims.items():
        embed_tables[col] = jax.random.normal(next(ki), (num_cat, dim), jnp.float32) * 0.1
        emb_out += dim

    D = num_numerical + emb_out
    H1, H2, H3 = 256, 128, 64
    D_pad = _round_up(D, 128)
    H3_pad = _round_up(H3, 128)

    def linear(k, fan_in, fan_out):
        kw, kb = jax.random.split(k)
        w = jax.random.normal(kw, (fan_in, fan_out), jnp.float32) / jnp.sqrt(fan_in)
        b = jax.random.normal(kb, (fan_out,), jnp.float32) * 0.01
        return w, b

    def bn(k, n):
        kg, kb2, km, kv = jax.random.split(k, 4)
        gamma = 1.0 + 0.1 * jax.random.normal(kg, (n,), jnp.float32)
        beta = 0.1 * jax.random.normal(kb2, (n,), jnp.float32)
        mean = 0.1 * jax.random.normal(km, (n,), jnp.float32)
        var = jnp.abs(jax.random.normal(kv, (n,), jnp.float32)) + 0.5
        return gamma, beta, mean, var

    w1, b1 = linear(next(ki), D, H1)
    w2, b2 = linear(next(ki), H1, H2)
    w3, b3 = linear(next(ki), H2, H3)
    wo, bo = linear(next(ki), H3, 1)

    s1, t1 = _fold_bn(b1, *bn(next(ki), H1))
    s2, t2 = _fold_bn(b2, *bn(next(ki), H2))
    s3, t3 = _fold_bn(b3, *bn(next(ki), H3))

    # Zero-pad the feature dim (D -> D_pad) and the 64-wide hidden (H3 -> H3_pad):
    # padded inputs/channels are exactly zero through every layer and contribute nothing.
    w1p = jnp.zeros((D_pad, H1), jnp.float32).at[:D, :].set(w1).astype(jnp.bfloat16)
    w2p = w2.astype(jnp.bfloat16)
    w3p = jnp.zeros((H2, H3_pad), jnp.float32).at[:, :H3].set(w3).astype(jnp.bfloat16)

    s3p = jnp.zeros((H3_pad,), jnp.float32).at[:H3].set(s3)
    t3p = jnp.zeros((H3_pad,), jnp.float32).at[:H3].set(t3)
    wop = jnp.zeros((1, H3_pad), jnp.float32).at[0, :H3].set(wo[:, 0])

    params = dict(
        w1=w1p, s1=s1[None, :], t1=t1[None, :],
        w2=w2p, s2=s2[None, :], t2=t2[None, :],
        w3=w3p, s3=s3p[None, :], t3=t3p[None, :],
        wo=wop, bo=bo,                      # bo: (1,) float32, lives in SMEM
    )
    return embed_tables, params, D


@jax.jit
def new_user_predictor_forward(numerical_feats, categorical_feats_dict,
                               embed_tables, params):
    """Full forward: embedding gather + concat (JAX glue), then fused Pallas MLP."""
    embedded = []
    for col, table in embed_tables.items():
        if col in categorical_feats_dict:
            ids = categorical_feats_dict[col]
            embedded.append(jnp.take(table, ids, axis=0))
    if embedded:
        combined = jnp.concatenate(embedded + [numerical_feats], axis=1)
    else:
        combined = numerical_feats
    return mlp_forward_pallas(combined.astype(jnp.float32), params)


# ---------------------------------- main -------------------------------------

if __name__ == "__main__":
    key = jax.random.PRNGKey(0)
    k_param, k_num, k_c1, k_c2 = jax.random.split(key, 4)

    B = 8
    num_numerical = 8
    embedding_dims = {
        "col_a": (10, 4),   # (num_categories, embed_dim)
        "col_b": (7, 4),
    }

    embed_tables, params, total_input_dim = init_params(
        k_param, num_numerical, embedding_dims)

    numerical_feats = jax.random.normal(k_num, (B, num_numerical), jnp.float32)
    categorical_feats_dict = {
        "col_a": jax.random.randint(k_c1, (B,), 0, 10, dtype=jnp.int32),
        "col_b": jax.random.randint(k_c2, (B,), 0, 7, dtype=jnp.int32),
    }

    out = new_user_predictor_forward(
        numerical_feats, categorical_feats_dict, embed_tables, params)
    out = jax.block_until_ready(out)

    assert out.shape == (B, 1), out.shape
    assert out.dtype == jnp.float32
    assert bool(jnp.all(jnp.isfinite(out)))
    print("KERNEL_OK")
</pallas_src>

<mosaic_0001>
module attributes {stable_mosaic.version = 11 : i64} {
  func.func @_mlp_kernel(%arg0: i32, %arg1: memref<8x128xbf16, #tpu.memory_space<vmem>>, %arg2: memref<128x256xbf16, #tpu.memory_space<vmem>>, %arg3: memref<1x256xf32, #tpu.memory_space<vmem>>, %arg4: memref<1x256xf32, #tpu.memory_space<vmem>>, %arg5: memref<256x128xbf16, #tpu.memory_space<vmem>>, %arg6: memref<1x128xf32, #tpu.memory_space<vmem>>, %arg7: memref<1x128xf32, #tpu.memory_space<vmem>>, %arg8: memref<128x128xbf16, #tpu.memory_space<vmem>>, %arg9: memref<1x128xf32, #tpu.memory_space<vmem>>, %arg10: memref<1x128xf32, #tpu.memory_space<vmem>>, %arg11: memref<1x128xf32, #tpu.memory_space<vmem>>, %arg12: memref<1xf32, #tpu.memory_space<smem>>, %arg13: memref<1x1x8xf32, #tpu.memory_space<vmem>>) attributes {dimension_semantics = [#tpu.dimension_semantics<parallel>], iteration_bounds = array<i64: 1>, scalar_prefetch = 0 : i64, scratch_operands = 0 : i64, tpu.core_type = #tpu.core_type<tc>, window_params = [{transform_indices = @transform_0, window_bounds = array<i64: 8, 128>}, {pipeline_mode = #tpu.pipeline_mode<synchronous>, transform_indices = @transform_1, window_bounds = array<i64: 128, 256>}, {pipeline_mode = #tpu.pipeline_mode<synchronous>, transform_indices = @transform_2, window_bounds = array<i64: 1, 256>}, {pipeline_mode = #tpu.pipeline_mode<synchronous>, transform_indices = @transform_3, window_bounds = array<i64: 1, 256>}, {pipeline_mode = #tpu.pipeline_mode<synchronous>, transform_indices = @transform_4, window_bounds = array<i64: 256, 128>}, {pipeline_mode = #tpu.pipeline_mode<synchronous>, transform_indices = @transform_5, window_bounds = array<i64: 1, 128>}, {pipeline_mode = #tpu.pipeline_mode<synchronous>, transform_indices = @transform_6, window_bounds = array<i64: 1, 128>}, {pipeline_mode = #tpu.pipeline_mode<synchronous>, transform_indices = @transform_7, window_bounds = array<i64: 128, 128>}, {pipeline_mode = #tpu.pipeline_mode<synchronous>, transform_indices = @transform_8, window_bounds = array<i64: 1, 128>}, {pipeline_mode = #tpu.pipeline_mode<synchronous>, transform_indices = @transform_9, window_bounds = array<i64: 1, 128>}, {pipeline_mode = #tpu.pipeline_mode<synchronous>, transform_indices = @transform_10, window_bounds = array<i64: 1, 128>}, {transform_indices = @transform_11, window_bounds = array<i64: 1>}, {transform_indices = @transform_12, window_bounds = array<i64: 1, 1, 8>}]} {
    %c0 = arith.constant 0 : index
    %c0_0 = arith.constant 0 : index
    %0 = vector.load %arg1[%c0, %c0_0] : memref<8x128xbf16, #tpu.memory_space<vmem>>, vector<8x128xbf16>
    %c0_1 = arith.constant 0 : index
    %c0_2 = arith.constant 0 : index
    %1 = vector.load %arg2[%c0_1, %c0_2] : memref<128x256xbf16, #tpu.memory_space<vmem>>, vector<128x256xbf16>
    %cst = arith.constant dense<0.000000e+00> : vector<8x256xf32>
    %2 = tpu.matmul %0, %1, %cst {dimension_numbers = #tpu.dot_dimension_numbers<[1], [0], [0], [1], [0, 0, 1, 1], [], []>} : vector<8x128xbf16>, vector<128x256xbf16>, vector<8x256xf32> -> vector<8x256xf32>
    %c0_3 = arith.constant 0 : index
    %c0_4 = arith.constant 0 : index
    %3 = vector.load %arg3[%c0_3, %c0_4] : memref<1x256xf32, #tpu.memory_space<vmem>>, vector<1x256xf32>
    %4 = vector.broadcast %3 : vector<1x256xf32> to vector<8x256xf32>
    %5 = arith.mulf %2, %4 : vector<8x256xf32>
    %c0_5 = arith.constant 0 : index
    %c0_6 = arith.constant 0 : index
    %6 = vector.load %arg4[%c0_5, %c0_6] : memref<1x256xf32, #tpu.memory_space<vmem>>, vector<1x256xf32>
    %7 = vector.broadcast %6 : vector<1x256xf32> to vector<8x256xf32>
    %8 = arith.addf %5, %7 : vector<8x256xf32>
    %cst_7 = arith.constant 0.000000e+00 : f32
    %9 = vector.broadcast %cst_7 : f32 to vector<8x256xf32>
    %10 = arith.maximumf %8, %9 : vector<8x256xf32>
    %11 = arith.truncf %10 : vector<8x256xf32> to vector<8x256xbf16>
    %c0_8 = arith.constant 0 : index
    %c0_9 = arith.constant 0 : index
    %12 = vector.load %arg5[%c0_8, %c0_9] : memref<256x128xbf16, #tpu.memory_space<vmem>>, vector<256x128xbf16>
    %cst_10 = arith.constant dense<0.000000e+00> : vector<8x128xf32>
    %13 = tpu.matmul %11, %12, %cst_10 {dimension_numbers = #tpu.dot_dimension_numbers<[1], [0], [0], [1], [0, 0, 1, 1], [], []>} : vector<8x256xbf16>, vector<256x128xbf16>, vector<8x128xf32> -> vector<8x128xf32>
    %c0_11 = arith.constant 0 : index
    %c0_12 = arith.constant 0 : index
    %14 = vector.load %arg6[%c0_11, %c0_12] : memref<1x128xf32, #tpu.memory_space<vmem>>, vector<1x128xf32>
    %15 = vector.broadcast %14 : vector<1x128xf32> to vector<8x128xf32>
    %16 = arith.mulf %13, %15 : vector<8x128xf32>
    %c0_13 = arith.constant 0 : index
    %c0_14 = arith.constant 0 : index
    %17 = vector.load %arg7[%c0_13, %c0_14] : memref<1x128xf32, #tpu.memory_space<vmem>>, vector<1x128xf32>
    %18 = vector.broadcast %17 : vector<1x128xf32> to vector<8x128xf32>
    %19 = arith.addf %16, %18 : vector<8x128xf32>
    %cst_15 = arith.constant 0.000000e+00 : f32
    %20 = vector.broadcast %cst_15 : f32 to vector<8x128xf32>
    %21 = arith.maximumf %19, %20 : vector<8x128xf32>
    %22 = arith.truncf %21 : vector<8x128xf32> to vector<8x128xbf16>
    %c0_16 = arith.constant 0 : index
    %c0_17 = arith.constant 0 : index
    %23 = vector.load %arg8[%c0_16, %c0_17] : memref<128x128xbf16, #tpu.memory_space<vmem>>, vector<128x128xbf16>
    %cst_18 = arith.constant dense<0.000000e+00> : vector<8x128xf32>
    %24 = tpu.matmul %22, %23, %cst_18 {dimension_numbers = #tpu.dot_dimension_numbers<[1], [0], [0], [1], [0, 0, 1, 1], [], []>} : vector<8x128xbf16>, vector<128x128xbf16>, vector<8x128xf32> -> vector<8x128xf32>
    %c0_19 = arith.constant 0 : index
    %c0_20 = arith.constant 0 : index
    %25 = vector.load %arg9[%c0_19, %c0_20] : memref<1x128xf32, #tpu.memory_space<vmem>>, vector<1x128xf32>
    %26 = vector.broadcast %25 : vector<1x128xf32> to vector<8x128xf32>
    %27 = arith.mulf %24, %26 : vector<8x128xf32>
    %c0_21 = arith.constant 0 : index
    %c0_22 = arith.constant 0 : index
    %28 = vector.load %arg10[%c0_21, %c0_22] : memref<1x128xf32, #tpu.memory_space<vmem>>, vector<1x128xf32>
    %29 = vector.broadcast %28 : vector<1x128xf32> to vector<8x128xf32>
    %30 = arith.addf %27, %29 : vector<8x128xf32>
    %cst_23 = arith.constant 0.000000e+00 : f32
    %31 = vector.broadcast %cst_23 : f32 to vector<8x128xf32>
    %32 = arith.maximumf %30, %31 : vector<8x128xf32>
    %c0_24 = arith.constant 0 : index
    %c0_25 = arith.constant 0 : index
    %33 = vector.load %arg11[%c0_24, %c0_25] : memref<1x128xf32, #tpu.memory_space<vmem>>, vector<1x128xf32>
    %34 = vector.broadcast %33 : vector<1x128xf32> to vector<8x128xf32>
    %35 = arith.mulf %32, %34 : vector<8x128xf32>
    %cst_26 = arith.constant dense<0.000000e+00> : vector<8xf32>
    %36 = vector.multi_reduction <add>, %35, %cst_26 [1] : vector<8x128xf32> to vector<8xf32>
    %c0_27 = arith.constant 0 : index
    %37 = memref.load %arg12[%c0_27] : memref<1xf32, #tpu.memory_space<smem>>
    %38 = vector.broadcast %37 : f32 to vector<8xf32>
    %39 = arith.addf %36, %38 : vector<8xf32>
    %40 = vector.shape_cast %39 : vector<8xf32> to vector<1x1x8xf32>
    %c0_28 = arith.constant 0 : index
    %c0_29 = arith.constant 0 : index
    %c0_30 = arith.constant 0 : index
    %41 = vector.load %arg13[%c0_28, %c0_29, %c0_30] : memref<1x1x8xf32, #tpu.memory_space<vmem>>, vector<1x1x8xf32>
    tpu.vector_store %arg13[%c0_28, %c0_29, %c0_30], %40 {strides = array<i32>} : memref<1x1x8xf32, #tpu.memory_space<vmem>>, vector<1x1x8xf32>,
    return
  }
  func.func @transform_0(%arg0: i32) -> (i32, i32) {
    %c0_i32 = arith.constant 0 : i32
    %c0_i32_0 = arith.constant 0 : i32
    return %arg0, %c0_i32 : i32, i32
  }
  func.func @transform_1(%arg0: i32) -> (i32, i32) {
    %c0_i32 = arith.constant 0 : i32
    %c0_i32_0 = arith.constant 0 : i32
    %c0_i32_1 = arith.constant 0 : i32
    return %c0_i32, %c0_i32_0 : i32, i32
  }
  func.func @transform_2(%arg0: i32) -> (i32, i32) {
    %c0_i32 = arith.constant 0 : i32
    %c0_i32_0 = arith.constant 0 : i32
    %c0_i32_1 = arith.constant 0 : i32
    return %c0_i32, %c0_i32_0 : i32, i32
  }
  func.func @transform_3(%arg0: i32) -> (i32, i32) {
    %c0_i32 = arith.constant 0 : i32
    %c0_i32_0 = arith.constant 0 : i32
    %c0_i32_1 = arith.constant 0 : i32
    return %c0_i32, %c0_i32_0 : i32, i32
  }
  func.func @transform_4(%arg0: i32) -> (i32, i32) {
    %c0_i32 = arith.constant 0 : i32
    %c0_i32_0 = arith.constant 0 : i32
    %c0_i32_1 = arith.constant 0 : i32
    return %c0_i32, %c0_i32_0 : i32, i32
  }
  func.func @transform_5(%arg0: i32) -> (i32, i32) {
    %c0_i32 = arith.constant 0 : i32
    %c0_i32_0 = arith.constant 0 : i32
    %c0_i32_1 = arith.constant 0 : i32
    return %c0_i32, %c0_i32_0 : i32, i32
  }
  func.func @transform_6(%arg0: i32) -> (i32, i32) {
    %c0_i32 = arith.constant 0 : i32
    %c0_i32_0 = arith.constant 0 : i32
    %c0_i32_1 = arith.constant 0 : i32
    return %c0_i32, %c0_i32_0 : i32, i32
  }
  func.func @transform_7(%arg0: i32) -> (i32, i32) {
    %c0_i32 = arith.constant 0 : i32
    %c0_i32_0 = arith.constant 0 : i32
    %c0_i32_1 = arith.constant 0 : i32
    return %c0_i32, %c0_i32_0 : i32, i32
  }
  func.func @transform_8(%arg0: i32) -> (i32, i32) {
    %c0_i32 = arith.constant 0 : i32
    %c0_i32_0 = arith.constant 0 : i32
    %c0_i32_1 = arith.constant 0 : i32
    return %c0_i32, %c0_i32_0 : i32, i32
  }
  func.func @transform_9(%arg0: i32) -> (i32, i32) {
    %c0_i32 = arith.constant 0 : i32
    %c0_i32_0 = arith.constant 0 : i32
    %c0_i32_1 = arith.constant 0 : i32
    return %c0_i32, %c0_i32_0 : i32, i32
  }
  func.func @transform_10(%arg0: i32) -> (i32, i32) {
    %c0_i32 = arith.constant 0 : i32
    %c0_i32_0 = arith.constant 0 : i32
    %c0_i32_1 = arith.constant 0 : i32
    return %c0_i32, %c0_i32_0 : i32, i32
  }
  func.func @transform_11(%arg0: i32) -> i32 {
    %c0_i32 = arith.constant 0 : i32
    %c0_i32_0 = arith.constant 0 : i32
    return %c0_i32 : i32
  }
  func.func @transform_12(%arg0: i32) -> (i32, i32, i32) {
    %c0_i32 = arith.constant 0 : i32
    %c0_i32_0 = arith.constant 0 : i32
    %c0_i32_1 = arith.constant 0 : i32
    return %arg0, %c0_i32, %c0_i32_0 : i32, i32, i32
  }
}

</mosaic_0001>

<llo_original>
// kernel: new_user_predictor_forward.1
$region0: #{new_user_predictor_forward.1}
  #allocation0 [shape = 'u32[]', space=smem, size = 0x4, offset = 0x4, fixed_abs, tag = 'smem constant byte address 0x4 - core index']
  #allocation1 [shape = 'u32[72,128]{1,0:T(1,128)}', space=vmem, size = 0x9000, scoped, tag = 'internal scratch']
  #allocation2 [shape = 'f32[1]{0:T(128)S(6)}', space=smem, size = 0x200, scoped, tag = 'scoped memory for new_user_predictor_forward.1']
  %s0 = inlined_call_operand.vmem [shape: bf16[8,128], index: 0, kind: input, shape index: {}]
  %s1 = inlined_call_operand.hbm [shape: bf16[128,256], index: 1, kind: input, shape index: {}]
  %s2 = inlined_call_operand.vmem [shape: f32[1,256], index: 2, kind: input, shape index: {}]
  %s3 = inlined_call_operand.vmem [shape: f32[1,256], index: 3, kind: input, shape index: {}]
  %s4 = inlined_call_operand.hbm [shape: bf16[256,128], index: 4, kind: input, shape index: {}]
  %s5 = inlined_call_operand.vmem [shape: f32[1,128], index: 5, kind: input, shape index: {}]
  %s6 = inlined_call_operand.vmem [shape: f32[1,128], index: 6, kind: input, shape index: {}]
  %s7 = inlined_call_operand.hbm [shape: bf16[128,128], index: 7, kind: input, shape index: {}]
  %s8 = inlined_call_operand.vmem [shape: f32[1,128], index: 8, kind: input, shape index: {}]
  %s9 = inlined_call_operand.vmem [shape: f32[1,128], index: 9, kind: input, shape index: {}]
  %s10 = inlined_call_operand.vmem [shape: f32[1,128], index: 10, kind: input, shape index: {}]
  %s11 = inlined_call_operand.<no memory space> [shape: f32[1], index: 11, kind: input, shape index: {}]
  %s12 = inlined_call_operand.hbm [shape: f32[1,1,8], index: 12, kind: output, shape index: {}]
  %s13 = sld [smem:[#allocation0]]
  $region70: #{new_user_predictor_forward.1} parent=0
    _
  %s15 = ssub.s32 1, %s13
  %s16 = scalar_select 0, %s15, %s13
  %17 = sst [smem:[#allocation2]] %s11
  $region1: #{new_user_predictor_forward.1} parent=0
    #allocation3 [shape = 'u8[65536]{0}', space=vmem, size = 0x10000, scoped, tag = 'input window, operand 1, single buffered']
    #allocation4 [shape = 's32[1]{0}', space=sflag, size = 0x4, scoped, tag = 'scoped memory for new_user_predictor_forward.1']
    #allocation5 [shape = 's32[1]{0}', space=sflag, size = 0x4, scoped, tag = 'scoped memory for new_user_predictor_forward.1']
    #allocation6 [shape = 'u8[65536]{0}', space=vmem, size = 0x10000, scoped, tag = 'input window, operand 4, single buffered']
    #allocation7 [shape = 's32[1]{0}', space=sflag, size = 0x4, scoped, tag = 'scoped memory for new_user_predictor_forward.1']
    #allocation8 [shape = 'u8[32768]{0}', space=vmem, size = 0x8000, scoped, tag = 'input window, operand 7, single buffered']
    #allocation9 [shape = 'u8[512]{0}', space=vmem, size = 0x400, scoped, tag = 'output window, operand 0, single buffered']
    %18 = vsyncpa [#allocation4], 0
    %19 = vsyncpa [#allocation7], 0
    %20 = vsyncpa [#allocation5], 0
    // Predicated region
    $region2: #{new_user_predictor_forward.1} parent=1 // pred_check
      _
    $region3: #{new_user_predictor_forward.1} parent=1 // pred_check_branch
      %22 = sbr.rel (0) target = $region5
    $region4: #{new_user_predictor_forward.1} parent=1 // pred_region
      _
    $region5: #{new_user_predictor_forward.1} parent=1 // pred_fallthru
      _
    // Predicated region
    $region6: #{new_user_predictor_forward.1} parent=1 // pred_check
      _
    $region7: #{new_user_predictor_forward.1} parent=1 // pred_check_branch
      %24 = sbr.rel (0) target = $region9
    $region8: #{new_user_predictor_forward.1} parent=1 // pred_region
      %26 = vsyncadd [#allocation4], 0
      %s27 = sshll.u32 %s1, 4
      %s28 = int_to_ptr.hbm [resolvable:$true] %s27
      %s29 = sshll.u32 [#allocation3], 4
      %s30 = int_to_ptr.vmem [resolvable:$true] %s29
      %35 = dma.hbm_to_vmem [thread:$0]  %s28, 2048, %s30, [#allocation4], 128, 128, 8
    $region9: #{new_user_predictor_forward.1} parent=1 // pred_fallthru
      _
    // Predicated region
    $region10: #{new_user_predictor_forward.1} parent=1 // pred_check
      _
    $region11: #{new_user_predictor_forward.1} parent=1 // pred_check_branch
      %37 = sbr.rel (0) target = $region13
    $region12: #{new_user_predictor_forward.1} parent=1 // pred_region
      _
    $region13: #{new_user_predictor_forward.1} parent=1 // pred_fallthru
      _
    // Predicated region
    $region14: #{new_user_predictor_forward.1} parent=1 // pred_check
      _
    $region15: #{new_user_predictor_forward.1} parent=1 // pred_check_branch
      %39 = sbr.rel (0) target = $region17
    $region16: #{new_user_predictor_forward.1} parent=1 // pred_region
      _
    $region17: #{new_user_predictor_forward.1} parent=1 // pred_fallthru
      _
    // Predicated region
    $region18: #{new_user_predictor_forward.1} parent=1 // pred_check
      _
    $region19: #{new_user_predictor_forward.1} parent=1 // pred_check_branch
      %41 = sbr.rel (0) target = $region21
    $region20: #{new_user_predictor_forward.1} parent=1 // pred_region
      %43 = vsyncadd [#allocation7], 0
      %s44 = sshll.u32 %s4, 4
      %s45 = int_to_ptr.hbm [resolvable:$true] %s44
      %s46 = sshll.u32 [#allocation6], 4
      %s47 = int_to_ptr.vmem [resolvable:$true] %s46
      %52 = dma.hbm_to_vmem [thread:$0]  %s45, 2048, %s47, [#allocation7], 64, 64, 4
    $region21: #{new_user_predictor_forward.1} parent=1 // pred_fallthru
      _
    // Predicated region
    $region22: #{new_user_predictor_forward.1} parent=1 // pred_check
      _
    $region23: #{new_user_predictor_forward.1} parent=1 // pred_check_branch
      %54 = sbr.rel (0) target = $region25
    $region24: #{new_user_predictor_forward.1} parent=1 // pred_region
      _
    $region25: #{new_user_predictor_forward.1} parent=1 // pred_fallthru
      _
    // Predicated region
    $region26: #{new_user_predictor_forward.1} parent=1 // pred_check
      _
    $region27: #{new_user_predictor_forward.1} parent=1 // pred_check_branch
      %56 = sbr.rel (0) target = $region29
    $region28: #{new_user_predictor_forward.1} parent=1 // pred_region
      _
    $region29: #{new_user_predictor_forward.1} parent=1 // pred_fallthru
      _
    // Predicated region
    $region30: #{new_user_predictor_forward.1} parent=1 // pred_check
      _
    $region31: #{new_user_predictor_forward.1} parent=1 // pred_check_branch
      %58 = sbr.rel (0) target = $region33
    $region32: #{new_user_predictor_forward.1} parent=1 // pred_region
      %60 = vsyncadd [#allocation7], 0
      %s61 = sshll.u32 %s7, 4
      %s62 = int_to_ptr.hbm [resolvable:$true] %s61
      %s63 = sshll.u32 [#allocation8], 4
      %s64 = int_to_ptr.vmem [resolvable:$true] %s63
      %69 = dma.hbm_to_vmem [thread:$0]  %s62, 1024, %s64, [#allocation7], 64, 64, 4
    $region33: #{new_user_predictor_forward.1} parent=1 // pred_fallthru
      _
    // Predicated region
    $region34: #{new_user_predictor_forward.1} parent=1 // pred_check
      _
    $region35: #{new_user_predictor_forward.1} parent=1 // pred_check_branch
      %71 = sbr.rel (0) target = $region37
    $region36: #{new_user_predictor_forward.1} parent=1 // pred_region
      _
    $region37: #{new_user_predictor_forward.1} parent=1 // pred_fallthru
      _
    // Predicated region
    $region38: #{new_user_predictor_forward.1} parent=1 // pred_check
      _
    $region39: #{new_user_predictor_forward.1} parent=1 // pred_check_branch
      %73 = sbr.rel (0) target = $region41
    $region40: #{new_user_predictor_forward.1} parent=1 // pred_region
      _
    $region41: #{new_user_predictor_forward.1} parent=1 // pred_fallthru
      _
    // Predicated region
    $region42: #{new_user_predictor_forward.1} parent=1 // pred_check
      _
    $region43: #{new_user_predictor_forward.1} parent=1 // pred_check_branch
      %75 = sbr.rel (0) target = $region45
    $region44: #{new_user_predictor_forward.1} parent=1 // pred_region
      _
    $region45: #{new_user_predictor_forward.1} parent=1 // pred_fallthru
      _
    // Predicated region
    $region46: #{new_user_predictor_forward.1} parent=1 // pred_check
      _
    $region47: #{new_user_predictor_forward.1} parent=1 // pred_check_branch
      %77 = sbr.rel (0) target = $region49
    $region48: #{new_user_predictor_forward.1} parent=1 // pred_region
      _
    $region49: #{new_user_predictor_forward.1} parent=1 // pred_fallthru
      _
    // Predicated region
    $region50: #{new_user_predictor_forward.1} parent=1 // pred_check
      _
    $region51: #{new_user_predictor_forward.1} parent=1 // pred_check_branch
      %79 = sbr.rel (0) target = $region53
    $region52: #{new_user_predictor_forward.1} parent=1 // pred_region
      %81 = dma.done [#allocation4], 2048
    $region53: #{new_user_predictor_forward.1} parent=1 // pred_fallthru
      _
    // Predicated region
    $region54: #{new_user_predictor_forward.1} parent=1 // pred_check
      _
    $region55: #{new_user_predictor_forward.1} parent=1 // pred_check_branch
      %83 = sbr.rel (0) target = $region57
    $region56: #{new_user_predictor_forward.1} parent=1 // pred_region
      %85 = dma.done [#allocation7], 2048
    $region57: #{new_user_predictor_forward.1} parent=1 // pred_fallthru
      _
    // Predicated region
    $region58: #{new_user_predictor_forward.1} parent=1 // pred_check
      _
    $region59: #{new_user_predictor_forward.1} parent=1 // pred_check_branch
      %87 = sbr.rel (0) target = $region61
    $region60: #{new_user_predictor_forward.1} parent=1 // pred_region
      %89 = dma.done [#allocation7], 1024
    $region61: #{new_user_predictor_forward.1} parent=1 // pred_fallthru
      _
    %v90 = vld [vmem:[%s0] sm:$0xf]
    %v91 = vld [vmem:[#allocation3] sm:$0xff]
    %v92 = vld [vmem:[#allocation3 + $0x8] sm:$0xff]
    %v93 = vld [vmem:[#allocation3 + $0x10] sm:$0xff]
    %v94 = vld [vmem:[#allocation3 + $0x18] sm:$0xff]
    %v95 = vld [vmem:[#allocation3 + $0x20] sm:$0xff]
    %v96 = vld [vmem:[#allocation3 + $0x28] sm:$0xff]
    %v97 = vld [vmem:[#allocation3 + $0x30] sm:$0xff]
    %v98 = vld [vmem:[#allocation3 + $0x38] sm:$0xff]
    %v99 = vld [vmem:[#allocation3 + $0x40] sm:$0xff]
    %v100 = vld [vmem:[#allocation3 + $0x48] sm:$0xff]
    %v101 = vld [vmem:[#allocation3 + $0x50] sm:$0xff]
    %v102 = vld [vmem:[#allocation3 + $0x58] sm:$0xff]
    %v103 = vld [vmem:[#allocation3 + $0x60] sm:$0xff]
    %v104 = vld [vmem:[#allocation3 + $0x68] sm:$0xff]
    %v105 = vld [vmem:[#allocation3 + $0x70] sm:$0xff]
    %v106 = vld [vmem:[#allocation3 + $0x78] sm:$0xff]
    %v123 = vunpack.c.l.b16 %v91
    %v124 = vunpack.c.h.b16 %v91
    %v125 = vunpack.c.l.b16 %v92
    %v126 = vunpack.c.h.b16 %v92
    %v127 = vunpack.c.l.b16 %v93
    %v128 = vunpack.c.h.b16 %v93
    %v129 = vunpack.c.l.b16 %v94
    %v130 = vunpack.c.h.b16 %v94
    %v131 = vunpack.c.l.b16 %v95
    %v132 = vunpack.c.h.b16 %v95
    %v133 = vunpack.c.l.b16 %v96
    %v134 = vunpack.c.h.b16 %v96
    %v135 = vunpack.c.l.b16 %v97
    %v136 = vunpack.c.h.b16 %v97
    %v137 = vunpack.c.l.b16 %v98
    %v138 = vunpack.c.h.b16 %v98
    %v139 = vunpack.c.l.b16 %v99
    %v140 = vunpack.c.h.b16 %v99
    %v141 = vunpack.c.l.b16 %v100
    %v142 = vunpack.c.h.b16 %v100
    %v143 = vunpack.c.l.b16 %v101
    %v144 = vunpack.c.h.b16 %v101
    %v145 = vunpack.c.l.b16 %v102
    %v146 = vunpack.c.h.b16 %v102
    %v147 = vunpack.c.l.b16 %v103
    %v148 = vunpack.c.h.b16 %v103
    %v149 = vunpack.c.l.b16 %v104
    %v150 = vunpack.c.h.b16 %v104
    %v151 = vunpack.c.l.b16 %v105
    %v152 = vunpack.c.h.b16 %v105
    %v153 = vunpack.c.l.b16 %v106
    %v154 = vunpack.c.h.b16 %v106
    %v155 = vpack.c.b16 %v125, %v123
    %v156 = vpack.c.b16 %v126, %v124
    %v157 = vpack.c.b16 %v129, %v127
    %v158 = vpack.c.b16 %v130, %v128
    %v159 = vpack.c.b16 %v133, %v131
    %v160 = vpack.c.b16 %v134, %v132
    %v161 = vpack.c.b16 %v137, %v135
    %v162 = vpack.c.b16 %v138, %v136
    %v163 = vpack.c.b16 %v141, %v139
    %v164 = vpack.c.b16 %v142, %v140
    %v165 = vpack.c.b16 %v145, %v143
    %v166 = vpack.c.b16 %v146, %v144
    %v167 = vpack.c.b16 %v149, %v147
    %v168 = vpack.c.b16 %v150, %v148
    %v169 = vpack.c.b16 %v153, %v151
    %v170 = vpack.c.b16 %v154, %v152
    %187 = vmatpush.bf16.msra.mxu0 %v169
    %188 = vmatpush.bf16.msra.mxu0 %v167
    %189 = vmatpush.bf16.msra.mxu0 %v165
    %190 = vmatpush.bf16.msra.mxu0 %v163
    %191 = vmatpush.bf16.msra.mxu0 %v161
    %192 = vmatpush.bf16.msra.mxu0 %v159
    %193 = vmatpush.bf16.msra.mxu0 %v157
    %194 = vmatpush.bf16.msra.mxu0 %v155
    %195 = vmatmul.bf16.gmra.mxu0 %v90
    %v196 = vpop.f32.mrf.mxu0
    %v197 = vadd.f32 0.0, %v196
    %v198 = vpop.f32.mrf.mxu0
    %199 = vdwg.mxu0
    %200 = vmatpush.bf16.msra.mxu0 %v170
    %201 = vmatpush.bf16.msra.mxu0 %v168
    %202 = vmatpush.bf16.msra.mxu0 %v166
    %203 = vmatpush.bf16.msra.mxu0 %v164
    %204 = vmatpush.bf16.msra.mxu0 %v162
    %205 = vmatpush.bf16.msra.mxu0 %v160
    %206 = vmatpush.bf16.msra.mxu0 %v158
    %207 = vmatpush.bf16.msra.mxu0 %v156
    %208 = vmatmul.bf16.gmra.mxu0 %v90
    %v209 = vpop.f32.mrf.mxu0
    %v210 = vadd.f32 0.0, %v209
    %v211 = vpop.f32.mrf.mxu0
    %212 = vdwg.mxu0
    %v213 = vld [vmem:[%s2] sm:$0x3]
    %v215 = vperm.slane %v213, 0
    %v216 = vperm.slane %v213, 1
    %v219 = vmul.f32 %v197, %v215
    %v220 = vmul.f32 %v210, %v216
    %v221 = vld [vmem:[%s3] sm:$0x3]
    %v223 = vperm.slane %v221, 0
    %v224 = vperm.slane %v221, 1
    %v227 = vadd.f32 %v219, %v223
    %v228 = vadd.f32 %v220, %v224
    %v229 = vmax.f32 %v227, 0.0
    %v230 = vmax.f32 %v228, 0.0
    %v231 = vpack.c.bf16 %v229, %v229
    %v232 = vpack.c.bf16 %v230, %v230
    %v233 = vld [vmem:[#allocation6] sm:$0xf]
    %v234 = vld [vmem:[#allocation6 + $0x4] sm:$0xf]
    %v235 = vld [vmem:[#allocation6 + $0x8] sm:$0xf]
    %v236 = vld [vmem:[#allocation6 + $0xc] sm:$0xf]
    %v237 = vld [vmem:[#allocation6 + $0x10] sm:$0xf]
    %v238 = vld [vmem:[#allocation6 + $0x14] sm:$0xf]
    %v239 = vld [vmem:[#allocation6 + $0x18] sm:$0xf]
    %v240 = vld [vmem:[#allocation6 + $0x1c] sm:$0xf]
    %v241 = vld [vmem:[#allocation6 + $0x20] sm:$0xf]
    %v242 = vld [vmem:[#allocation6 + $0x24] sm:$0xf]
    %v243 = vld [vmem:[#allocation6 + $0x28] sm:$0xf]
    %v244 = vld [vmem:[#allocation6 + $0x2c] sm:$0xf]
    %v245 = vld [vmem:[#allocation6 + $0x30] sm:$0xf]
    %v246 = vld [vmem:[#allocation6 + $0x34] sm:$0xf]
    %v247 = vld [vmem:[#allocation6 + $0x38] sm:$0xf]
    %v248 = vld [vmem:[#allocation6 + $0x3c] sm:$0xf]
    %v249 = vld [vmem:[#allocation6 + $0x40] sm:$0xf]
    %v250 = vld [vmem:[#allocation6 + $0x44] sm:$0xf]
    %v251 = vld [vmem:[#allocation6 + $0x48] sm:$0xf]
    %v252 = vld [vmem:[#allocation6 + $0x4c] sm:$0xf]
    %v253 = vld [vmem:[#allocation6 + $0x50] sm:$0xf]
    %v254 = vld [vmem:[#allocation6 + $0x54] sm:$0xf]
    %v255 = vld [vmem:[#allocation6 + $0x58] sm:$0xf]
    %v256 = vld [vmem:[#allocation6 + $0x5c] sm:$0xf]
    %v257 = vld [vmem:[#allocation6 + $0x60] sm:$0xf]
    %v258 = vld [vmem:[#allocation6 + $0x64] sm:$0xf]
    %v259 = vld [vmem:[#allocation6 + $0x68] sm:$0xf]
    %v260 = vld [vmem:[#allocation6 + $0x6c] sm:$0xf]
    %v261 = vld [vmem:[#allocation6 + $0x70] sm:$0xf]
    %v262 = vld [vmem:[#allocation6 + $0x74] sm:$0xf]
    %v263 = vld [vmem:[#allocation6 + $0x78] sm:$0xf]
    %v264 = vld [vmem:[#allocation6 + $0x7c] sm:$0xf]
    %v297 = vunpack.c.l.b16 %v233
    %v298 = vunpack.c.l.b16 %v234
    %v299 = vunpack.c.l.b16 %v235
    %v300 = vunpack.c.l.b16 %v236
    %v301 = vunpack.c.l.b16 %v237
    %v302 = vunpack.c.l.b16 %v238
    %v303 = vunpack.c.l.b16 %v239
    %v304 = vunpack.c.l.b16 %v240
    %v305 = vunpack.c.l.b16 %v241
    %v306 = vunpack.c.l.b16 %v242
    %v307 = vunpack.c.l.b16 %v243
    %v308 = vunpack.c.l.b16 %v244
    %v309 = vunpack.c.l.b16 %v245
    %v310 = vunpack.c.l.b16 %v246
    %v311 = vunpack.c.l.b16 %v247
    %v312 = vunpack.c.l.b16 %v248
    %v313 = vunpack.c.l.b16 %v249
    %v314 = vunpack.c.l.b16 %v250
    %v315 = vunpack.c.l.b16 %v251
    %v316 = vunpack.c.l.b16 %v252
    %v317 = vunpack.c.l.b16 %v253
    %v318 = vunpack.c.l.b16 %v254
    %v319 = vunpack.c.l.b16 %v255
    %v320 = vunpack.c.l.b16 %v256
    %v321 = vunpack.c.l.b16 %v257
    %v322 = vunpack.c.l.b16 %v258
    %v323 = vunpack.c.l.b16 %v259
    %v324 = vunpack.c.l.b16 %v260
    %v325 = vunpack.c.l.b16 %v261
    %v326 = vunpack.c.l.b16 %v262
    %v327 = vunpack.c.l.b16 %v263
    %v328 = vunpack.c.l.b16 %v264
    %v329 = vpack.c.b16 %v298, %v297
    %v330 = vpack.c.b16 %v300, %v299
    %v331 = vpack.c.b16 %v302, %v301
    %v332 = vpack.c.b16 %v304, %v303
    %v333 = vpack.c.b16 %v306, %v305
    %v334 = vpack.c.b16 %v308, %v307
    %v335 = vpack.c.b16 %v310, %v309
    %v336 = vpack.c.b16 %v312, %v311
    %v337 = vpack.c.b16 %v314, %v313
    %v338 = vpack.c.b16 %v316, %v315
    %v339 = vpack.c.b16 %v318, %v317
    %v340 = vpack.c.b16 %v320, %v319
    %v341 = vpack.c.b16 %v322, %v321
    %v342 = vpack.c.b16 %v324, %v323
    %v343 = vpack.c.b16 %v326, %v325
    %v344 = vpack.c.b16 %v328, %v327
    %361 = vmatpush.bf16.msra.mxu0 %v336
    %362 = vmatpush.bf16.msra.mxu0 %v335
    %363 = vmatpush.bf16.msra.mxu0 %v334
    %364 = vmatpush.bf16.msra.mxu0 %v333
    %365 = vmatpush.bf16.msra.mxu0 %v332
    %366 = vmatpush.bf16.msra.mxu0 %v331
    %367 = vmatpush.bf16.msra.mxu0 %v330
    %368 = vmatpush.bf16.msra.mxu0 %v329
    %369 = vmatmul.bf16.gmra.mxu0 %v231
    %v370 = vpop.f32.mrf.mxu0
    %v371 = vadd.f32 0.0, %v370
    %v372 = vpop.f32.mrf.mxu0
    %373 = vdwg.mxu0
    %374 = vmatpush.bf16.msra.mxu0 %v344
    %375 = vmatpush.bf16.msra.mxu0 %v343
    %376 = vmatpush.bf16.msra.mxu0 %v342
    %377 = vmatpush.bf16.msra.mxu0 %v341
    %378 = vmatpush.bf16.msra.mxu0 %v340
    %379 = vmatpush.bf16.msra.mxu0 %v339
    %380 = vmatpush.bf16.msra.mxu0 %v338
    %381 = vmatpush.bf16.msra.mxu0 %v337
    %382 = vmatmul.bf16.gmra.mxu0 %v232
    %v383 = vpop.f32.mrf.mxu0
    %v384 = vadd.f32 %v371, %v383
    %v385 = vpop.f32.mrf.mxu0
    %386 = vdwg.mxu0
    %v387 = vld [vmem:[%s5] sm:$0x1]
    %v389 = vperm.slane %v387, 0
    %v391 = vmul.f32 %v384, %v389
    %v392 = vld [vmem:[%s6] sm:$0x1]
    %v394 = vperm.slane %v392, 0
    %v396 = vadd.f32 %v391, %v394
    %v397 = vmax.f32 %v396, 0.0
    %v398 = vpack.c.bf16 %v397, %v397
    %v399 = vld [vmem:[#allocation8] sm:$0xf]
    %v400 = vld [vmem:[#allocation8 + $0x4] sm:$0xf]
    %v401 = vld [vmem:[#allocation8 + $0x8] sm:$0xf]
    %v402 = vld [vmem:[#allocation8 + $0xc] sm:$0xf]
    %v403 = vld [vmem:[#allocation8 + $0x10] sm:$0xf]
    %v404 = vld [vmem:[#allocation8 + $0x14] sm:$0xf]
    %v405 = vld [vmem:[#allocation8 + $0x18] sm:$0xf]
    %v406 = vld [vmem:[#allocation8 + $0x1c] sm:$0xf]
    %v407 = vld [vmem:[#allocation8 + $0x20] sm:$0xf]
    %v408 = vld [vmem:[#allocation8 + $0x24] sm:$0xf]
    %v409 = vld [vmem:[#allocation8 + $0x28] sm:$0xf]
    %v410 = vld [vmem:[#allocation8 + $0x2c] sm:$0xf]
    %v411 = vld [vmem:[#allocation8 + $0x30] sm:$0xf]
    %v412 = vld [vmem:[#allocation8 + $0x34] sm:$0xf]
    %v413 = vld [vmem:[#allocation8 + $0x38] sm:$0xf]
    %v414 = vld [vmem:[#allocation8 + $0x3c] sm:$0xf]
    %v431 = vunpack.c.l.b16 %v399
    %v432 = vunpack.c.l.b16 %v400
    %v433 = vunpack.c.l.b16 %v401
    %v434 = vunpack.c.l.b16 %v402
    %v435 = vunpack.c.l.b16 %v403
    %v436 = vunpack.c.l.b16 %v404
    %v437 = vunpack.c.l.b16 %v405
    %v438 = vunpack.c.l.b16 %v406
    %v439 = vunpack.c.l.b16 %v407
    %v440 = vunpack.c.l.b16 %v408
    %v441 = vunpack.c.l.b16 %v409
    %v442 = vunpack.c.l.b16 %v410
    %v443 = vunpack.c.l.b16 %v411
    %v444 = vunpack.c.l.b16 %v412
    %v445 = vunpack.c.l.b16 %v413
    %v446 = vunpack.c.l.b16 %v414
    %v447 = vpack.c.b16 %v432, %v431
    %v448 = vpack.c.b16 %v434, %v433
    %v449 = vpack.c.b16 %v436, %v435
    %v450 = vpack.c.b16 %v438, %v437
    %v451 = vpack.c.b16 %v440, %v439
    %v452 = vpack.c.b16 %v442, %v441
    %v453 = vpack.c.b16 %v444, %v443
    %v454 = vpack.c.b16 %v446, %v445
    %463 = vmatpush.bf16.msra.mxu0 %v454
    %464 = vmatpush.bf16.msra.mxu0 %v453
    %465 = vmatpush.bf16.msra.mxu0 %v452
    %466 = vmatpush.bf16.msra.mxu0 %v451
    %467 = vmatpush.bf16.msra.mxu0 %v450
    %468 = vmatpush.bf16.msra.mxu0 %v449
    %469 = vmatpush.bf16.msra.mxu0 %v448
    %470 = vmatpush.bf16.msra.mxu0 %v447
    %471 = vmatmul.bf16.gmra.mxu0 %v398
    %v472 = vpop.f32.mrf.mxu0
    %v473 = vadd.f32 0.0, %v472
    %v474 = vpop.f32.mrf.mxu0
    %475 = vdwg.mxu0
    %v476 = vld [vmem:[%s8] sm:$0x1]
    %v478 = vperm.slane %v476, 0
    %v480 = vmul.f32 %v473, %v478
    %v481 = vld [vmem:[%s9] sm:$0x1]
    %v483 = vperm.slane %v481, 0
    %v485 = vadd.f32 %v480, %v483
    %v486 = vmax.f32 %v485, 0.0
    %v487 = vld [vmem:[%s10] sm:$0x1]
    %v489 = vperm.slane %v487, 0
    %v491 = vmul.f32 %v486, %v489
    %492 = vadd.xlane.f32.xlu0 %v491
    %v493 = vpop.xlane.xlu0 %492
    %s494 = sld [smem:[#allocation2]]
    %v495 = vstv %s494
    %v496 = vadd.f32 %v493, %v495
    %v498 = vlaneseq
    %v499 = vand.u32 %v498, 127
    %v500 = vperm.slane %v496, %v499
    %vm502 = vcmask 57344
    %503 = vst.msk [vmem:[#allocation9] sm:$0x1] %vm502, %v500
    // Predicated region
    $region62: #{new_user_predictor_forward.1} parent=1 // pred_check
      _
    $region63: #{new_user_predictor_forward.1} parent=1 // pred_check_branch
      %505 = sbr.rel (0) target = $region65
    $region64: #{new_user_predictor_forward.1} parent=1 // pred_region
      %507 = vsyncadd [#allocation5], 0
      %s509 = sshll.u32 [#allocation9], 4
      %s510 = int_to_ptr.vmem [resolvable:$true] %s509
      %s511 = sshll.u32 %s12, 4
      %s512 = int_to_ptr.hbm [resolvable:$true] %s511
      %514 = dma.vmem_to_hbm [thread:$0]  %s510, 16, %s512, [#allocation5]
    $region65: #{new_user_predictor_forward.1} parent=1 // pred_fallthru
      _
    // Predicated region
    $region66: #{new_user_predictor_forward.1} parent=1 // pred_check
      _
    $region67: #{new_user_predictor_forward.1} parent=1 // pred_check_branch
      %516 = sbr.rel (0) target = $region69
    $region68: #{new_user_predictor_forward.1} parent=1 // pred_region
      %518 = dma.done [#allocation5], 16
    $region69: #{new_user_predictor_forward.1} parent=1 // pred_fallthru
      _
    %519 = vsyncpa [#allocation4], 1
    %520 = vsyncpa [#allocation7], 1
    %521 = vsyncpa [#allocation5], 1

</llo_original>
